<compile_context>
chip_gen: v6e
topology: v6e:2x2x1
jax: 0.10.0
libtpu: 0.0.40
codegen_flags: <defaults>
</compile_context>

<pallas_src>
import jax
import jax.numpy as jnp
from jax.experimental import pallas as pl
from jax.experimental.pallas import tpu as pltpu


def _round_up(n, m):
    return ((n + m - 1) // m) * m


def dqn_kernel(x_ref, w1_ref, b1_ref, w2_ref, b2_ref, w3_ref, b3_ref,
               wo_ref, bo_ref, out_ref):
    # Compute dtype for MXU operands (bf16 by default, f32 optional);
    # accumulation is always f32 via preferred_element_type.
    cdt = w1_ref.dtype
    x = x_ref[...].astype(cdt)

    # encoder layer 1: Linear + ReLU (bias/ReLU in f32 on the VPU, fused down-cast)
    h = jnp.dot(x, w1_ref[...], preferred_element_type=jnp.float32)
    h = jnp.maximum(h + b1_ref[...], 0.0).astype(cdt)

    # encoder layer 2: Linear + ReLU
    h = jnp.dot(h, w2_ref[...], preferred_element_type=jnp.float32)
    h = jnp.maximum(h + b2_ref[...], 0.0).astype(cdt)

    # encoder layer 3: Linear + ReLU
    h = jnp.dot(h, w3_ref[...], preferred_element_type=jnp.float32)
    h = jnp.maximum(h + b3_ref[...], 0.0).astype(cdt)

    # output head: Linear (no activation) -> Q values, stored at true out_dim.
    q = jnp.dot(h, wo_ref[...], preferred_element_type=jnp.float32)
    out_ref[...] = (q + bo_ref[...]).astype(out_ref.dtype)


def prepare_params(params, param_dtype=jnp.bfloat16):
    """Pad hidden dims to 128 lanes and cast weights ONCE (at init / target-net sync).

    params: (w1, b1, w2, b2, w3, b3, wo, bo) with w_l shaped (in_features, out_features)
            (i.e. the transpose of PyTorch's nn.Linear weight) and b_l shaped
            (1, out_features) or (out_features,).
    """
    w1, b1, w2, b2, w3, b3, wo, bo = params
    in_dim, hidden = w1.shape
    out_dim = wo.shape[1]
    H_P = _round_up(hidden, 128)

    def pad2(a, rows, cols, dtype):
        a = jnp.asarray(a, dtype).reshape(-1, a.shape[-1]) if a.ndim == 1 else jnp.asarray(a, dtype)
        return jnp.pad(a, ((0, rows - a.shape[0]), (0, cols - a.shape[1])))

    tensors = (
        pad2(w1, in_dim, H_P, param_dtype),          # (in_dim, H_P)   unpadded K
        pad2(b1, 1, H_P, jnp.float32),               # (1, H_P)        f32 bias
        pad2(w2, H_P, H_P, param_dtype),             # (H_P, H_P)
        pad2(b2, 1, H_P, jnp.float32),
        pad2(w3, H_P, H_P, param_dtype),             # (H_P, H_P)
        pad2(b3, 1, H_P, jnp.float32),
        pad2(wo, H_P, out_dim, param_dtype),         # (H_P, out_dim)  unpadded N
        jnp.asarray(bo, jnp.float32).reshape(1, out_dim),
    )
    dims = {"input_dim": int(in_dim), "hidden_dim": int(hidden),
            "out_dim": int(out_dim)}
    return {"tensors": tensors, "dims": dims}


def deep_q_network_forward(x, prepared, *, tile_batch=1024):
    """Fused DQN forward. x: (B, input_dim). Returns (B, out_dim) float32 Q-values."""
    tensors = prepared["tensors"]
    dims = prepared["dims"]
    w1p, b1p, w2p, b2p, w3p, b3p, wop, bop = tensors

    in_dim = dims["input_dim"]
    hidden = dims["hidden_dim"]
    out_dim = dims["out_dim"]
    H_P = w1p.shape[1]

    B = x.shape[0]
    assert x.shape[1] == in_dim, "x feature dim must match input_dim"

    # Batch tile: big tiles amortize per-grid-step overhead, but cap at ~B/2 so
    # the 'parallel' batch axis has >=2 steps (v7x megacore uses both TCs).
    TB = min(int(tile_batch), _round_up(B, 8))
    if B >= 16:
        TB = min(TB, _round_up(-(-B // 2), 8))
    TB = max(8, _round_up(TB, 8))
    B_P = _round_up(B, TB)
    grid = (B_P // TB,)

    # Batch padding only if B doesn't divide into tiles (at most TB-1 tiny rows).
    xk = x if B_P == B else jnp.pad(x, ((0, B_P - B), (0, 0)))

    # x / out stream per batch tile; weights & biases are VMEM-resident
    # (constant index_map => fetched once, held across the batch loop).
    in_specs = [
        pl.BlockSpec((TB, in_dim), lambda i: (i, 0)),      # x  (unpadded K)
        pl.BlockSpec((in_dim, H_P), lambda i: (0, 0)),     # w1
        pl.BlockSpec((1, H_P), lambda i: (0, 0)),          # b1
        pl.BlockSpec((H_P, H_P), lambda i: (0, 0)),        # w2
        pl.BlockSpec((1, H_P), lambda i: (0, 0)),          # b2
        pl.BlockSpec((H_P, H_P), lambda i: (0, 0)),        # w3
        pl.BlockSpec((1, H_P), lambda i: (0, 0)),          # b3
        pl.BlockSpec((H_P, out_dim), lambda i: (0, 0)),    # wo (unpadded N)
        pl.BlockSpec((1, out_dim), lambda i: (0, 0)),      # bo
    ]
    out_spec = pl.BlockSpec((TB, out_dim), lambda i: (i, 0))

    # Cost estimate from TRUE dims (don't overstate work to XLA's scheduler).
    flops = 2 * B * (in_dim * hidden + 2 * hidden * hidden + hidden * out_dim)
    param_bytes = sum(int(t.size) * t.dtype.itemsize for t in tensors)
    bytes_accessed = (int(x.size) * x.dtype.itemsize
                      + param_bytes
                      + B * out_dim * 4)

    out = pl.pallas_call(
        dqn_kernel,
        out_shape=jax.ShapeDtypeStruct((B_P, out_dim), jnp.float32),
        grid=grid,
        in_specs=in_specs,
        out_specs=out_spec,
        compiler_params=pltpu.CompilerParams(
            dimension_semantics=("parallel",),   # megacore sharding on v7x
        ),
        cost_estimate=pl.CostEstimate(
            flops=flops, transcendentals=0, bytes_accessed=bytes_accessed),
    )(xk, w1p, b1p, w2p, b2p, w3p, b3p, wop, bop)

    return out if B_P == B else out[:B]

    # TODO(synk): optional int8 weight path (per-channel scale, f32 accumulate)
    # for v5e/v6e inference; must stay disabled on v7x (fp8-only MXU).


def init_params(key, input_dim, hidden_dim, out_dim):
    """Deterministic synthetic parameters (PyTorch-style uniform fan-in init)."""
    keys = jax.random.split(key, 8)

    def linear(kw, kb, fan_in, fan_out):
        bound = 1.0 / jnp.sqrt(fan_in)
        w = jax.random.uniform(kw, (fan_in, fan_out), jnp.float32, -bound, bound)
        b = jax.random.uniform(kb, (1, fan_out), jnp.float32, -bound, bound)
        return w, b

    w1, b1 = linear(keys[0], keys[1], input_dim, hidden_dim)
    w2, b2 = linear(keys[2], keys[3], hidden_dim, hidden_dim)
    w3, b3 = linear(keys[4], keys[5], hidden_dim, hidden_dim)
    wo, bo = linear(keys[6], keys[7], hidden_dim, out_dim)
    return (w1, b1, w2, b2, w3, b3, wo, bo)


def reference_forward(x, params):
    """Pure-JAX reference mirroring the PyTorch module."""
    w1, b1, w2, b2, w3, b3, wo, bo = params
    h = jnp.maximum(x @ w1 + b1, 0.0)
    h = jnp.maximum(h @ w2 + b2, 0.0)
    h = jnp.maximum(h @ w3 + b3, 0.0)
    return h @ wo + bo


if __name__ == "__main__":
    batch = 128
    input_dim = 16
    hidden_dim = 32
    out_dim = 4

    key = jax.random.PRNGKey(0)
    k_x, k_p = jax.random.split(key)

    x = jax.random.normal(k_x, (batch, input_dim), jnp.float32)
    params = init_params(k_p, input_dim, hidden_dim, out_dim)
    q_ref = reference_forward(x, params)

    # f32-weight path with a small tile so the multi-step batch grid
    # (pipelining + both megacore TCs) is exercised; exact vs reference.
    prep_f32 = prepare_params(params, param_dtype=jnp.float32)
    q_values = deep_q_network_forward(x, prep_f32, tile_batch=32)
    q_values = jax.block_until_ready(q_values)
    assert q_values.shape == (batch, out_dim)
    assert jnp.allclose(q_values, q_ref, atol=1e-5, rtol=1e-5)

    # Default path: bf16 weights/activations (MXU-native on v5e/v6e/v7x),
    # f32 accumulation, default tile_batch (capped to ~B/2 -> 2 grid steps).
    prep_bf16 = prepare_params(params)
    q_bf16 = deep_q_network_forward(x, prep_bf16)
    q_bf16 = jax.block_until_ready(q_bf16)
    assert q_bf16.shape == (batch, out_dim)
    assert bool(jnp.all(jnp.isfinite(q_bf16)))
    assert float(jnp.max(jnp.abs(q_bf16 - q_ref))) < 0.5

    print("KERNEL_OK")
</pallas_src>

<mosaic_0001>
module attributes {stable_mosaic.version = 11 : i64} {
  func.func @dqn_kernel(%arg0: i32, %arg1: memref<32x16xf32, #tpu.memory_space<vmem>>, %arg2: memref<16x128xf32, #tpu.memory_space<vmem>>, %arg3: memref<1x128xf32, #tpu.memory_space<vmem>>, %arg4: memref<128x128xf32, #tpu.memory_space<vmem>>, %arg5: memref<1x128xf32, #tpu.memory_space<vmem>>, %arg6: memref<128x128xf32, #tpu.memory_space<vmem>>, %arg7: memref<1x128xf32, #tpu.memory_space<vmem>>, %arg8: memref<128x4xf32, #tpu.memory_space<vmem>>, %arg9: memref<1x4xf32, #tpu.memory_space<vmem>>, %arg10: memref<32x4xf32, #tpu.memory_space<vmem>>) attributes {dimension_semantics = [#tpu.dimension_semantics<parallel>], iteration_bounds = array<i64: 4>, scalar_prefetch = 0 : i64, scratch_operands = 0 : i64, tpu.core_type = #tpu.core_type<tc>, window_params = [{transform_indices = @transform_0, window_bounds = array<i64: 32, 16>}, {pipeline_mode = #tpu.pipeline_mode<synchronous>, transform_indices = @transform_1, window_bounds = array<i64: 16, 128>}, {pipeline_mode = #tpu.pipeline_mode<synchronous>, transform_indices = @transform_2, window_bounds = array<i64: 1, 128>}, {pipeline_mode = #tpu.pipeline_mode<synchronous>, transform_indices = @transform_3, window_bounds = array<i64: 128, 128>}, {pipeline_mode = #tpu.pipeline_mode<synchronous>, transform_indices = @transform_4, window_bounds = array<i64: 1, 128>}, {pipeline_mode = #tpu.pipeline_mode<synchronous>, transform_indices = @transform_5, window_bounds = array<i64: 128, 128>}, {pipeline_mode = #tpu.pipeline_mode<synchronous>, transform_indices = @transform_6, window_bounds = array<i64: 1, 128>}, {pipeline_mode = #tpu.pipeline_mode<synchronous>, transform_indices = @transform_7, window_bounds = array<i64: 128, 4>}, {pipeline_mode = #tpu.pipeline_mode<synchronous>, transform_indices = @transform_8, window_bounds = array<i64: 1, 4>}, {transform_indices = @transform_9, window_bounds = array<i64: 32, 4>}]} {
    %c0 = arith.constant 0 : index
    %c0_0 = arith.constant 0 : index
    %0 = vector.load %arg1[%c0, %c0_0] : memref<32x16xf32, #tpu.memory_space<vmem>>, vector<32x16xf32>
    %c0_1 = arith.constant 0 : index
    %c0_2 = arith.constant 0 : index
    %1 = vector.load %arg2[%c0_1, %c0_2] : memref<16x128xf32, #tpu.memory_space<vmem>>, vector<16x128xf32>
    %cst = arith.constant dense<0.000000e+00> : vector<32x128xf32>
    %2 = tpu.matmul %0, %1, %cst {dimension_numbers = #tpu.dot_dimension_numbers<[1], [0], [0], [1], [0, 0, 1, 1], [], []>} : vector<32x16xf32>, vector<16x128xf32>, vector<32x128xf32> -> vector<32x128xf32>
    %c0_3 = arith.constant 0 : index
    %c0_4 = arith.constant 0 : index
    %3 = vector.load %arg3[%c0_3, %c0_4] : memref<1x128xf32, #tpu.memory_space<vmem>>, vector<1x128xf32>
    %4 = vector.broadcast %3 : vector<1x128xf32> to vector<32x128xf32>
    %5 = arith.addf %2, %4 : vector<32x128xf32>
    %cst_5 = arith.constant 0.000000e+00 : f32
    %6 = vector.broadcast %cst_5 : f32 to vector<32x128xf32>
    %7 = arith.maximumf %5, %6 : vector<32x128xf32>
    %c0_6 = arith.constant 0 : index
    %c0_7 = arith.constant 0 : index
    %8 = vector.load %arg4[%c0_6, %c0_7] : memref<128x128xf32, #tpu.memory_space<vmem>>, vector<128x128xf32>
    %cst_8 = arith.constant dense<0.000000e+00> : vector<32x128xf32>
    %9 = tpu.matmul %7, %8, %cst_8 {dimension_numbers = #tpu.dot_dimension_numbers<[1], [0], [0], [1], [0, 0, 1, 1], [], []>} : vector<32x128xf32>, vector<128x128xf32>, vector<32x128xf32> -> vector<32x128xf32>
    %c0_9 = arith.constant 0 : index
    %c0_10 = arith.constant 0 : index
    %10 = vector.load %arg5[%c0_9, %c0_10] : memref<1x128xf32, #tpu.memory_space<vmem>>, vector<1x128xf32>
    %11 = vector.broadcast %10 : vector<1x128xf32> to vector<32x128xf32>
    %12 = arith.addf %9, %11 : vector<32x128xf32>
    %cst_11 = arith.constant 0.000000e+00 : f32
    %13 = vector.broadcast %cst_11 : f32 to vector<32x128xf32>
    %14 = arith.maximumf %12, %13 : vector<32x128xf32>
    %c0_12 = arith.constant 0 : index
    %c0_13 = arith.constant 0 : index
    %15 = vector.load %arg6[%c0_12, %c0_13] : memref<128x128xf32, #tpu.memory_space<vmem>>, vector<128x128xf32>
    %cst_14 = arith.constant dense<0.000000e+00> : vector<32x128xf32>
    %16 = tpu.matmul %14, %15, %cst_14 {dimension_numbers = #tpu.dot_dimension_numbers<[1], [0], [0], [1], [0, 0, 1, 1], [], []>} : vector<32x128xf32>, vector<128x128xf32>, vector<32x128xf32> -> vector<32x128xf32>
    %c0_15 = arith.constant 0 : index
    %c0_16 = arith.constant 0 : index
    %17 = vector.load %arg7[%c0_15, %c0_16] : memref<1x128xf32, #tpu.memory_space<vmem>>, vector<1x128xf32>
    %18 = vector.broadcast %17 : vector<1x128xf32> to vector<32x128xf32>
    %19 = arith.addf %16, %18 : vector<32x128xf32>
    %cst_17 = arith.constant 0.000000e+00 : f32
    %20 = vector.broadcast %cst_17 : f32 to vector<32x128xf32>
    %21 = arith.maximumf %19, %20 : vector<32x128xf32>
    %c0_18 = arith.constant 0 : index
    %c0_19 = arith.constant 0 : index
    %22 = vector.load %arg8[%c0_18, %c0_19] : memref<128x4xf32, #tpu.memory_space<vmem>>, vector<128x4xf32>
    %cst_20 = arith.constant dense<0.000000e+00> : vector<32x4xf32>
    %23 = tpu.matmul %21, %22, %cst_20 {dimension_numbers = #tpu.dot_dimension_numbers<[1], [0], [0], [1], [0, 0, 1, 1], [], []>} : vector<32x128xf32>, vector<128x4xf32>, vector<32x4xf32> -> vector<32x4xf32>
    %c0_21 = arith.constant 0 : index
    %c0_22 = arith.constant 0 : index
    %24 = vector.load %arg9[%c0_21, %c0_22] : memref<1x4xf32, #tpu.memory_space<vmem>>, vector<1x4xf32>
    %25 = vector.broadcast %24 : vector<1x4xf32> to vector<32x4xf32>
    %26 = arith.addf %23, %25 : vector<32x4xf32>
    %c0_23 = arith.constant 0 : index
    %c0_24 = arith.constant 0 : index
    %27 = vector.load %arg10[%c0_23, %c0_24] : memref<32x4xf32, #tpu.memory_space<vmem>>, vector<32x4xf32>
    tpu.vector_store %arg10[%c0_23, %c0_24], %26 {strides = array<i32>} : memref<32x4xf32, #tpu.memory_space<vmem>>, vector<32x4xf32>,
    return
  }
  func.func @transform_0(%arg0: i32) -> (i32, i32) {
    %c0_i32 = arith.constant 0 : i32
    %c0_i32_0 = arith.constant 0 : i32
    return %arg0, %c0_i32 : i32, i32
  }
  func.func @transform_1(%arg0: i32) -> (i32, i32) {
    %c0_i32 = arith.constant 0 : i32
    %c0_i32_0 = arith.constant 0 : i32
    %c0_i32_1 = arith.constant 0 : i32
    return %c0_i32, %c0_i32_0 : i32, i32
  }
  func.func @transform_2(%arg0: i32) -> (i32, i32) {
    %c0_i32 = arith.constant 0 : i32
    %c0_i32_0 = arith.constant 0 : i32
    %c0_i32_1 = arith.constant 0 : i32
    return %c0_i32, %c0_i32_0 : i32, i32
  }
  func.func @transform_3(%arg0: i32) -> (i32, i32) {
    %c0_i32 = arith.constant 0 : i32
    %c0_i32_0 = arith.constant 0 : i32
    %c0_i32_1 = arith.constant 0 : i32
    return %c0_i32, %c0_i32_0 : i32, i32
  }
  func.func @transform_4(%arg0: i32) -> (i32, i32) {
    %c0_i32 = arith.constant 0 : i32
    %c0_i32_0 = arith.constant 0 : i32
    %c0_i32_1 = arith.constant 0 : i32
    return %c0_i32, %c0_i32_0 : i32, i32
  }
  func.func @transform_5(%arg0: i32) -> (i32, i32) {
    %c0_i32 = arith.constant 0 : i32
    %c0_i32_0 = arith.constant 0 : i32
    %c0_i32_1 = arith.constant 0 : i32
    return %c0_i32, %c0_i32_0 : i32, i32
  }
  func.func @transform_6(%arg0: i32) -> (i32, i32) {
    %c0_i32 = arith.constant 0 : i32
    %c0_i32_0 = arith.constant 0 : i32
    %c0_i32_1 = arith.constant 0 : i32
    return %c0_i32, %c0_i32_0 : i32, i32
  }
  func.func @transform_7(%arg0: i32) -> (i32, i32) {
    %c0_i32 = arith.constant 0 : i32
    %c0_i32_0 = arith.constant 0 : i32
    %c0_i32_1 = arith.constant 0 : i32
    return %c0_i32, %c0_i32_0 : i32, i32
  }
  func.func @transform_8(%arg0: i32) -> (i32, i32) {
    %c0_i32 = arith.constant 0 : i32
    %c0_i32_0 = arith.constant 0 : i32
    %c0_i32_1 = arith.constant 0 : i32
    return %c0_i32, %c0_i32_0 : i32, i32
  }
  func.func @transform_9(%arg0: i32) -> (i32, i32) {
    %c0_i32 = arith.constant 0 : i32
    %c0_i32_0 = arith.constant 0 : i32
    return %arg0, %c0_i32 : i32, i32
  }
}

</mosaic_0001>

<llo_original>
// kernel: tpu_custom_call.1
$region0: #{tpu_custom_call.1}
  #allocation0 [shape = 'u32[]', space=smem, size = 0x4, offset = 0x4, fixed_abs, tag = 'smem constant byte address 0x4 - core index']
  #allocation1 [shape = 'u32[144,128]{1,0:T(1,128)}', space=vmem, size = 0x12000, scoped, tag = 'internal scratch']
  %s0 = inlined_call_operand.vmem [shape: f32[128,16], index: 0, kind: input, shape index: {}]
  %s1 = inlined_call_operand.vmem [shape: f32[16,128], index: 1, kind: input, shape index: {}]
  %s2 = inlined_call_operand.vmem [shape: f32[1,128], index: 2, kind: input, shape index: {}]
  %s3 = inlined_call_operand.vmem [shape: f32[128,128], index: 3, kind: input, shape index: {}]
  %s4 = inlined_call_operand.vmem [shape: f32[1,128], index: 4, kind: input, shape index: {}]
  %s5 = inlined_call_operand.vmem [shape: f32[128,128], index: 5, kind: input, shape index: {}]
  %s6 = inlined_call_operand.vmem [shape: f32[1,128], index: 6, kind: input, shape index: {}]
  %s7 = inlined_call_operand.vmem [shape: f32[128,4], index: 7, kind: input, shape index: {}]
  %s8 = inlined_call_operand.vmem [shape: f32[1,4], index: 8, kind: input, shape index: {}]
  %s9 = inlined_call_operand.vmem [shape: f32[128,4], index: 9, kind: output, shape index: {}]
  %s10 = sld [smem:[#allocation0]]
  $region69: #{tpu_custom_call.1} parent=0
    _
  %s12 = ssub.s32 1, %s10
  %s13 = scalar_select 0, %s12, %s10
  loop: start=0, step=1, limit=6
  $region2: #{tpu_custom_call.1} parent=0 // loop_pre_header
    _
  $region3: #{tpu_custom_call.1} parent=0 // loop_header
    %s15 = sphi 0, %s19
    %p16 = scmp.ge.s32.totalorder %s15, 6
    %s25 = sphi 0, %s27
    %s28 = sphi 0, %s25
    %s29 = sphi 0, %s28
    %s45 = sphi 0, %s29
    %s49 = sphi 0, %s49
    %s51 = sphi 0, %s49
    %s52 = sphi 0, %s51
    %s66 = sphi 0, %s52
    %s70 = sphi 0, %s70
    %s72 = sphi 0, %s70
    %s73 = sphi 0, %s72
    %s87 = sphi 0, %s73
    %s91 = sphi 0, %s91
    %s93 = sphi 0, %s91
    %s94 = sphi 0, %s93
    %s108 = sphi 0, %s94
    %s112 = sphi 0, %s112
    %s114 = sphi 0, %s112
    %s115 = sphi 0, %s114
    %s129 = sphi 0, %s115
    %s133 = sphi 0, %s133
    %s135 = sphi 0, %s133
    %s136 = sphi 0, %s135
    %s150 = sphi 0, %s136
    %s154 = sphi 0, %s154
    %s156 = sphi 0, %s154
    %s157 = sphi 0, %s156
    %s171 = sphi 0, %s157
    %s175 = sphi 0, %s175
    %s177 = sphi 0, %s175
    %s178 = sphi 0, %s177
    %s192 = sphi 0, %s178
    %s196 = sphi 0, %s196
    %s198 = sphi 0, %s196
    %s199 = sphi 0, %s198
    %s213 = sphi 0, %s199
    %s219 = sphi 0, %s221
    %s222 = sphi 0, %s219
    %s223 = sphi 0, %s222
    %s239 = sphi 0, %s223
  $region4: #{tpu_custom_call.1} parent=0 // loop_header_branch
    %18 = sbr.rel (%p16) target = $region8
  $region5: #{tpu_custom_call.1} parent=0 // loop_body
    %s20 = ssub.s32 %s15, 1
    %s21 = ssub.s32 %s15, 2
    %s22 = sadd.s32 %s15, 1
    %s23 = ssub.s32 %s15, %s22
    %p24 = scmp.eq.s32.totalorder %s23, 0
    %s26 = sadd.s32 %s25, 1
    %s27 = scalar_select %p24, %s25, %s26
    %p30 = pneg %p24
    %p31 = scmp.eq.s32.totalorder %s15, 3
    %p32 = por %p30, %p31
    %p33 = scmp.ne.s32.totalorder %s25, %s28
    %p34 = scmp.eq.s32.totalorder %s15, 0
    %p35 = por %p33, %p34
    %p36 = scmp.ne.s32.totalorder %s25, %s28
    %p37 = scmp.eq.s32.totalorder %s20, 3
    %p38 = por %p36, %p37
    %p39 = scmp.ne.s32.totalorder %s28, %s29
    %p40 = scmp.eq.s32.totalorder %s20, 0
    %p41 = por %p39, %p40
    %p42 = scmp.ne.s32.totalorder %s28, %s29
    %p43 = scmp.eq.s32.totalorder %s21, 3
    %p44 = por %p42, %p43
    %p46 = scmp.ne.s32.totalorder %s29, %s45
    %p47 = scmp.eq.s32.totalorder %s21, 0
    %p48 = por %p46, %p47
    %s50 = sadd.s32 %s49, 1
    %p53 = scmp.eq.s32.totalorder %s15, 3
    %p54 = scmp.ne.s32.totalorder %s49, %s51
    %p55 = scmp.eq.s32.totalorder %s15, 0
    %p56 = por %p54, %p55
    %p57 = scmp.ne.s32.totalorder %s49, %s51
    %p58 = scmp.eq.s32.totalorder %s20, 3
    %p59 = por %p57, %p58
    %p60 = scmp.ne.s32.totalorder %s51, %s52
    %p61 = scmp.eq.s32.totalorder %s20, 0
    %p62 = por %p60, %p61
    %p63 = scmp.ne.s32.totalorder %s51, %s52
    %p64 = scmp.eq.s32.totalorder %s21, 3
    %p65 = por %p63, %p64
    %p67 = scmp.ne.s32.totalorder %s52, %s66
    %p68 = scmp.eq.s32.totalorder %s21, 0
    %p69 = por %p67, %p68
    %s71 = sadd.s32 %s70, 1
    %p74 = scmp.eq.s32.totalorder %s15, 3
    %p75 = scmp.ne.s32.totalorder %s70, %s72
    %p76 = scmp.eq.s32.totalorder %s15, 0
    %p77 = por %p75, %p76
    %p78 = scmp.ne.s32.totalorder %s70, %s72
    %p79 = scmp.eq.s32.totalorder %s20, 3
    %p80 = por %p78, %p79
    %p81 = scmp.ne.s32.totalorder %s72, %s73
    %p82 = scmp.eq.s32.totalorder %s20, 0
    %p83 = por %p81, %p82
    %p84 = scmp.ne.s32.totalorder %s72, %s73
    %p85 = scmp.eq.s32.totalorder %s21, 3
    %p86 = por %p84, %p85
    %p88 = scmp.ne.s32.totalorder %s73, %s87
    %p89 = scmp.eq.s32.totalorder %s21, 0
    %p90 = por %p88, %p89
    %s92 = sadd.s32 %s91, 1
    %p95 = scmp.eq.s32.totalorder %s15, 3
    %p96 = scmp.ne.s32.totalorder %s91, %s93
    %p97 = scmp.eq.s32.totalorder %s15, 0
    %p98 = por %p96, %p97
    %p99 = scmp.ne.s32.totalorder %s91, %s93
    %p100 = scmp.eq.s32.totalorder %s20, 3
    %p101 = por %p99, %p100
    %p102 = scmp.ne.s32.totalorder %s93, %s94
    %p103 = scmp.eq.s32.totalorder %s20, 0
    %p104 = por %p102, %p103
    %p105 = scmp.ne.s32.totalorder %s93, %s94
    %p106 = scmp.eq.s32.totalorder %s21, 3
    %p107 = por %p105, %p106
    %p109 = scmp.ne.s32.totalorder %s94, %s108
    %p110 = scmp.eq.s32.totalorder %s21, 0
    %p111 = por %p109, %p110
    %s113 = sadd.s32 %s112, 1
    %p116 = scmp.eq.s32.totalorder %s15, 3
    %p117 = scmp.ne.s32.totalorder %s112, %s114
    %p118 = scmp.eq.s32.totalorder %s15, 0
    %p119 = por %p117, %p118
    %p120 = scmp.ne.s32.totalorder %s112, %s114
    %p121 = scmp.eq.s32.totalorder %s20, 3
    %p122 = por %p120, %p121
    %p123 = scmp.ne.s32.totalorder %s114, %s115
    %p124 = scmp.eq.s32.totalorder %s20, 0
    %p125 = por %p123, %p124
    %p126 = scmp.ne.s32.totalorder %s114, %s115
    %p127 = scmp.eq.s32.totalorder %s21, 3
    %p128 = por %p126, %p127
    %p130 = scmp.ne.s32.totalorder %s115, %s129
    %p131 = scmp.eq.s32.totalorder %s21, 0
    %p132 = por %p130, %p131
    %s134 = sadd.s32 %s133, 1
    %p137 = scmp.eq.s32.totalorder %s15, 3
    %p138 = scmp.ne.s32.totalorder %s133, %s135
    %p139 = scmp.eq.s32.totalorder %s15, 0
    %p140 = por %p138, %p139
    %p141 = scmp.ne.s32.totalorder %s133, %s135
    %p142 = scmp.eq.s32.totalorder %s20, 3
    %p143 = por %p141, %p142
    %p144 = scmp.ne.s32.totalorder %s135, %s136
    %p145 = scmp.eq.s32.totalorder %s20, 0
    %p146 = por %p144, %p145
    %p147 = scmp.ne.s32.totalorder %s135, %s136
    %p148 = scmp.eq.s32.totalorder %s21, 3
    %p149 = por %p147, %p148
    %p151 = scmp.ne.s32.totalorder %s136, %s150
    %p152 = scmp.eq.s32.totalorder %s21, 0
    %p153 = por %p151, %p152
    %s155 = sadd.s32 %s154, 1
    %p158 = scmp.eq.s32.totalorder %s15, 3
    %p159 = scmp.ne.s32.totalorder %s154, %s156
    %p160 = scmp.eq.s32.totalorder %s15, 0
    %p161 = por %p159, %p160
    %p162 = scmp.ne.s32.totalorder %s154, %s156
    %p163 = scmp.eq.s32.totalorder %s20, 3
    %p164 = por %p162, %p163
    %p165 = scmp.ne.s32.totalorder %s156, %s157
    %p166 = scmp.eq.s32.totalorder %s20, 0
    %p167 = por %p165, %p166
    %p168 = scmp.ne.s32.totalorder %s156, %s157
    %p169 = scmp.eq.s32.totalorder %s21, 3
    %p170 = por %p168, %p169
    %p172 = scmp.ne.s32.totalorder %s157, %s171
    %p173 = scmp.eq.s32.totalorder %s21, 0
    %p174 = por %p172, %p173
    %s176 = sadd.s32 %s175, 1
    %p179 = scmp.eq.s32.totalorder %s15, 3
    %p180 = scmp.ne.s32.totalorder %s175, %s177
    %p181 = scmp.eq.s32.totalorder %s15, 0
    %p182 = por %p180, %p181
    %p183 = scmp.ne.s32.totalorder %s175, %s177
    %p184 = scmp.eq.s32.totalorder %s20, 3
    %p185 = por %p183, %p184
    %p186 = scmp.ne.s32.totalorder %s177, %s178
    %p187 = scmp.eq.s32.totalorder %s20, 0
    %p188 = por %p186, %p187
    %p189 = scmp.ne.s32.totalorder %s177, %s178
    %p190 = scmp.eq.s32.totalorder %s21, 3
    %p191 = por %p189, %p190
    %p193 = scmp.ne.s32.totalorder %s178, %s192
    %p194 = scmp.eq.s32.totalorder %s21, 0
    %p195 = por %p193, %p194
    %s197 = sadd.s32 %s196, 1
    %p200 = scmp.eq.s32.totalorder %s15, 3
    %p201 = scmp.ne.s32.totalorder %s196, %s198
    %p202 = scmp.eq.s32.totalorder %s15, 0
    %p203 = por %p201, %p202
    %p204 = scmp.ne.s32.totalorder %s196, %s198
    %p205 = scmp.eq.s32.totalorder %s20, 3
    %p206 = por %p204, %p205
    %p207 = scmp.ne.s32.totalorder %s198, %s199
    %p208 = scmp.eq.s32.totalorder %s20, 0
    %p209 = por %p207, %p208
    %p210 = scmp.ne.s32.totalorder %s198, %s199
    %p211 = scmp.eq.s32.totalorder %s21, 3
    %p212 = por %p210, %p211
    %p214 = scmp.ne.s32.totalorder %s199, %s213
    %p215 = scmp.eq.s32.totalorder %s21, 0
    %p216 = por %p214, %p215
    %s217 = ssub.s32 %s15, %s22
    %p218 = scmp.eq.s32.totalorder %s217, 0
    %s220 = sadd.s32 %s219, 1
    %s221 = scalar_select %p218, %s219, %s220
    %p224 = pneg %p218
    %p225 = scmp.eq.s32.totalorder %s15, 3
    %p226 = por %p224, %p225
    %p227 = scmp.ne.s32.totalorder %s219, %s222
    %p228 = scmp.eq.s32.totalorder %s15, 0
    %p229 = por %p227, %p228
    %p230 = scmp.ne.s32.totalorder %s219, %s222
    %p231 = scmp.eq.s32.totalorder %s20, 3
    %p232 = por %p230, %p231
    %p233 = scmp.ne.s32.totalorder %s222, %s223
    %p234 = scmp.eq.s32.totalorder %s20, 0
    %p235 = por %p233, %p234
    %p236 = scmp.ne.s32.totalorder %s222, %s223
    %p237 = scmp.eq.s32.totalorder %s21, 3
    %p238 = por %p236, %p237
    %p240 = scmp.ne.s32.totalorder %s223, %s239
    %p241 = scmp.eq.s32.totalorder %s21, 0
    %p242 = por %p240, %p241
    %p243 = scmp.le.s32.totalorder 1, %s15
    %p244 = scmp.lt.s32.totalorder %s15, 5
    %p245 = pnand %p243, %p244
    %p246 = pneg %p245
    // Predicated region
    $region9: #{tpu_custom_call.1} parent=5 // pred_check
      _
    $region10: #{tpu_custom_call.1} parent=5 // pred_check_branch
      %248 = sbr.rel (%p245) target = $region12
    $region11: #{tpu_custom_call.1} parent=5 // pred_region
      %s249 = ssub.s32 %s15, 1
      // Predicated region
      $region13: #{tpu_custom_call.1} parent=11 // pred_check
        %p250 = pneg %p62
      $region14: #{tpu_custom_call.1} parent=11 // pred_check_branch
        %252 = sbr.rel (%p250) target = $region16
      $region15: #{tpu_custom_call.1} parent=11 // pred_region
        _
      $region16: #{tpu_custom_call.1} parent=11 // pred_fallthru
        _
      // Predicated region
      $region17: #{tpu_custom_call.1} parent=11 // pred_check
        %p253 = pneg %p83
      $region18: #{tpu_custom_call.1} parent=11 // pred_check_branch
        %255 = sbr.rel (%p253) target = $region20
      $region19: #{tpu_custom_call.1} parent=11 // pred_region
        _
      $region20: #{tpu_custom_call.1} parent=11 // pred_fallthru
        _
      // Predicated region
      $region21: #{tpu_custom_call.1} parent=11 // pred_check
        %p256 = pneg %p104
      $region22: #{tpu_custom_call.1} parent=11 // pred_check_branch
        %258 = sbr.rel (%p256) target = $region24
      $region23: #{tpu_custom_call.1} parent=11 // pred_region
        _
      $region24: #{tpu_custom_call.1} parent=11 // pred_fallthru
        _
      // Predicated region
      $region25: #{tpu_custom_call.1} parent=11 // pred_check
        %p259 = pneg %p125
      $region26: #{tpu_custom_call.1} parent=11 // pred_check_branch
        %261 = sbr.rel (%p259) target = $region28
      $region27: #{tpu_custom_call.1} parent=11 // pred_region
        _
      $region28: #{tpu_custom_call.1} parent=11 // pred_fallthru
        _
      // Predicated region
      $region29: #{tpu_custom_call.1} parent=11 // pred_check
        %p262 = pneg %p146
      $region30: #{tpu_custom_call.1} parent=11 // pred_check_branch
        %264 = sbr.rel (%p262) target = $region32
      $region31: #{tpu_custom_call.1} parent=11 // pred_region
        _
      $region32: #{tpu_custom_call.1} parent=11 // pred_fallthru
        _
      // Predicated region
      $region33: #{tpu_custom_call.1} parent=11 // pred_check
        %p265 = pneg %p167
      $region34: #{tpu_custom_call.1} parent=11 // pred_check_branch
        %267 = sbr.rel (%p265) target = $region36
      $region35: #{tpu_custom_call.1} parent=11 // pred_region
        _
      $region36: #{tpu_custom_call.1} parent=11 // pred_fallthru
        _
      // Predicated region
      $region37: #{tpu_custom_call.1} parent=11 // pred_check
        %p268 = pneg %p188
      $region38: #{tpu_custom_call.1} parent=11 // pred_check_branch
        %270 = sbr.rel (%p268) target = $region40
      $region39: #{tpu_custom_call.1} parent=11 // pred_region
        _
      $region40: #{tpu_custom_call.1} parent=11 // pred_fallthru
        _
      // Predicated region
      $region41: #{tpu_custom_call.1} parent=11 // pred_check
        %p271 = pneg %p209
      $region42: #{tpu_custom_call.1} parent=11 // pred_check_branch
        %273 = sbr.rel (%p271) target = $region44
      $region43: #{tpu_custom_call.1} parent=11 // pred_region
        _
      $region44: #{tpu_custom_call.1} parent=11 // pred_fallthru
        _
    $region12: #{tpu_custom_call.1} parent=5 // pred_fallthru
      _
    %p274 = scmp.lt.s32.totalorder %s15, 4
    // Predicated region
    $region45: #{tpu_custom_call.1} parent=5 // pred_check
      %p275 = pneg %p274
    $region46: #{tpu_custom_call.1} parent=5 // pred_check_branch
      %277 = sbr.rel (%p275) target = $region48
    $region47: #{tpu_custom_call.1} parent=5 // pred_region
      // Predicated region
      $region49: #{tpu_custom_call.1} parent=47 // pred_check
        %p278 = pneg %p35
      $region50: #{tpu_custom_call.1} parent=47 // pred_check_branch
        %280 = sbr.rel (%p278) target = $region52
      $region51: #{tpu_custom_call.1} parent=47 // pred_region
        %s281 = smul.u32 4, %s15
        %p282 = scmp.lt.s32.totalorder %s281, 15
        %s283 = scalar_select %p282, %s281, 15
        %s284 = smul.addr %s283, 8
        %s285 = scalar_lea.vmem %s0, %s284
        %s286 = smul.u32 4, %s15
      $region52: #{tpu_custom_call.1} parent=47 // pred_fallthru
        _
    $region48: #{tpu_custom_call.1} parent=5 // pred_fallthru
      _
    %p287 = scmp.le.s32.totalorder 1, %s15
    %p288 = scmp.lt.s32.totalorder %s15, 5
    %p289 = pnand %p287, %p288
    %p290 = pneg %p289
    // Predicated region
    $region53: #{tpu_custom_call.1} parent=5 // pred_check
      _
    $region54: #{tpu_custom_call.1} parent=5 // pred_check_branch
      %292 = sbr.rel (%p289) target = $region56
    $region55: #{tpu_custom_call.1} parent=5 // pred_region
      %s293 = ssub.s32 %s15, 1
      %s294 = smul.u32 4, %s20
      %p295 = scmp.lt.s32.totalorder %s294, 15
      %s296 = scalar_select %p295, %s294, 15
      %s297 = smul.addr %s296, 8
      %s298 = scalar_lea.vmem %s0, %s297
      %p299 = pneg %p41
      %p300 = pneg %p38
      %p301 = pneg %p62
      %p302 = pneg %p59
      %p303 = pneg %p83
      %p304 = pneg %p80
      %p305 = pneg %p104
      %p306 = pneg %p101
      %p307 = pneg %p125
      %p308 = pneg %p122
      %p309 = pneg %p146
      %p310 = pneg %p143
      %p311 = pneg %p167
      %p312 = pneg %p164
      %p313 = pneg %p188
      %p314 = pneg %p185
      %p315 = pneg %p209
      %p316 = pneg %p206
      %p317 = pneg %p235
      %p318 = pneg %p232
      %s319 = smul.u32 4, %s20
      %p320 = scmp.lt.s32.totalorder %s319, 15
      %s321 = scalar_select %p320, %s319, 15
      %s322 = smul.addr %s321, 8
      %s323 = scalar_lea.vmem %s9, %s322
      %s324 = smul.u32 4, %s20
      %p325 = scmp.lt.s32.totalorder %s324, 15
      %s326 = scalar_select %p325, %s324, 15
      %s327 = smul.addr %s326, 8
      %s328 = scalar_lea.vmem %s0, %s327
      %s329 = smul.u32 4, %s20
      %s330 = smul.u32 4, %s20
      %p331 = scmp.lt.s32.totalorder %s330, 15
      %s332 = scalar_select %p331, %s330, 15
      %s333 = smul.addr %s332, 8
      %s334 = scalar_lea.vmem %s9, %s333
      %s335 = smul.u32 4, %s20
      %v336 = vld [vmem:[%s328] sm:$0xff]
      %v337 = vld [vmem:[%s328 + $0x8] sm:$0xff]
      %v338 = vld [vmem:[%s328 + $0x10] sm:$0xff]
      %v339 = vld [vmem:[%s328 + $0x18] sm:$0xff]
      %v340 = vld [vmem:[%s1] sm:$0xff]
      %v341 = vld [vmem:[%s1 + $0x8] sm:$0xff]
      %v342 = vld [vmem:[%s2] sm:$0x1]
      %v344 = vlaneseq
      %v345 = vshrl.u32 %v344, 7
      %v346 = vsub.s32 0, %v345
      %v347 = vrot.slane %v342, %v346
      %vm349 = vcmask 130048
      %v351 = vsel %vm349, %v336, 0
      %v354 = vsel %vm349, %v337, 0
      %v357 = vsel %vm349, %v338, 0
      %v360 = vsel %vm349, %v339, 0
      %362 = vmatprep.subr.mxu0 0.0
      %363 = vmatpush1.msra.mxu0 0.0
      %364 = vmatprep.subr.mxu0 0.0
      %365 = vmatpush1.msra.mxu0 0.0
      %366 = vmatprep.subr.mxu0 0.0
      %367 = vmatpush1.msra.mxu0 0.0
      %368 = vmatprep.subr.mxu0 0.0
      %369 = vmatpush1.msra.mxu0 0.0
      %370 = vmatprep.subr.mxu0 0.0
      %371 = vmatpush1.msra.mxu0 0.0
      %372 = vmatprep.subr.mxu0 0.0
      %373 = vmatpush1.msra.mxu0 0.0
      %374 = vmatprep.subr.mxu0 0.0
      %375 = vmatpush1.msra.mxu0 0.0
      %376 = vmatprep.subr.mxu0 0.0
      %377 = vmatpush1.msra.mxu0 0.0
      %378 = vmatprep.subr.mxu0 0.0
      %379 = vmatpush1.msra.mxu0 0.0
      %380 = vmatprep.subr.mxu0 0.0
      %381 = vmatpush1.msra.mxu0 0.0
      %382 = vmatprep.subr.mxu0 0.0
      %383 = vmatpush1.msra.mxu0 0.0
      %384 = vmatprep.subr.mxu0 0.0
      %385 = vmatpush1.msra.mxu0 0.0
      %386 = vmatprep.subr.mxu0 0.0
      %387 = vmatpush1.msra.mxu0 0.0
      %388 = vmatprep.subr.mxu0 0.0
      %389 = vmatpush1.msra.mxu0 0.0
      %390 = vmatprep.subr.mxu0 0.0
      %391 = vmatpush1.msra.mxu0 %v341
      %392 = vmatprep.subr.mxu0 0.0
      %393 = vmatpush1.msra.mxu0 %v340
      %394 = vmatprep.subr.mxu0 0.0
      %395 = vmatpush2.msra.mxu0 0.0
      %396 = vmatprep.subr.mxu0 0.0
      %397 = vmatpush2.msra.mxu0 0.0
      %398 = vmatprep.subr.mxu0 0.0
      %399 = vmatpush2.msra.mxu0 0.0
      %400 = vmatprep.subr.mxu0 0.0
      %401 = vmatpush2.msra.mxu0 0.0
      %402 = vmatprep.subr.mxu0 0.0
      %403 = vmatpush2.msra.mxu0 0.0
      %404 = vmatprep.subr.mxu0 0.0
      %405 = vmatpush2.msra.mxu0 0.0
      %406 = vmatprep.subr.mxu0 0.0
      %407 = vmatpush2.msra.mxu0 0.0
      %408 = vmatprep.subr.mxu0 0.0
      %409 = vmatpush2.msra.mxu0 0.0
      %410 = vmatprep.subr.mxu0 0.0
      %411 = vmatpush2.msra.mxu0 0.0
      %412 = vmatprep.subr.mxu0 0.0
      %413 = vmatpush2.msra.mxu0 0.0
      %414 = vmatprep.subr.mxu0 0.0
      %415 = vmatpush2.msra.mxu0 0.0
      %416 = vmatprep.subr.mxu0 0.0
      %417 = vmatpush2.msra.mxu0 0.0
      %418 = vmatprep.subr.mxu0 0.0
      %419 = vmatpush2.msra.mxu0 0.0
      %420 = vmatprep.subr.mxu0 0.0
      %421 = vmatpush2.msra.mxu0 0.0
      %422 = vmatprep.subr.mxu0 0.0
      %423 = vmatpush2.msra.mxu0 0.0
      %424 = vmatprep.subr.mxu0 0.0
      %425 = vmatpush2.msra.mxu0 0.0
      %426 = vmatprep.mubr.f32.mxu0 0.0
      %427 = vmatmul.mubr.f32.gmra.mxu0 %v351
      %v428 = vpop.f32.mrf.mxu0
      %v429 = vadd.f32 %v347, %v428
      %v430 = vpop.f32.mrf.mxu0
      %431 = vmatprep.mubr.f32.mxu0 0.0
      %432 = vmatmul.mubr.f32.gmra.mxu0 %v354
      %v433 = vpop.f32.mrf.mxu0
      %v434 = vadd.f32 %v347, %v433
      %v435 = vpop.f32.mrf.mxu0
      %436 = vmatprep.mubr.f32.mxu0 0.0
      %437 = vmatmul.mubr.f32.gmra.mxu0 %v357
      %v438 = vpop.f32.mrf.mxu0
      %v439 = vadd.f32 %v347, %v438
      %v440 = vpop.f32.mrf.mxu0
      %441 = vmatprep.mubr.f32.mxu0 0.0
      %442 = vmatmul.mubr.f32.gmra.mxu0 %v360
      %v443 = vpop.f32.mrf.mxu0
      %v444 = vadd.f32 %v347, %v443
      %v445 = vpop.f32.mrf.mxu0
      %446 = vdwg.mxu0
      %v447 = vmax.f32 %v429, 0.0
      %v448 = vmax.f32 %v434, 0.0
      %v449 = vmax.f32 %v439, 0.0
      %v450 = vmax.f32 %v444, 0.0
      %v451 = vld [vmem:[%s3] sm:$0xff]
      %v452 = vld [vmem:[%s3 + $0x8] sm:$0xff]
      %v453 = vld [vmem:[%s3 + $0x10] sm:$0xff]
      %v454 = vld [vmem:[%s3 + $0x18] sm:$0xff]
      %v455 = vld [vmem:[%s3 + $0x20] sm:$0xff]
      %v456 = vld [vmem:[%s3 + $0x28] sm:$0xff]
      %v457 = vld [vmem:[%s3 + $0x30] sm:$0xff]
      %v458 = vld [vmem:[%s3 + $0x38] sm:$0xff]
      %v459 = vld [vmem:[%s3 + $0x40] sm:$0xff]
      %v460 = vld [vmem:[%s3 + $0x48] sm:$0xff]
      %v461 = vld [vmem:[%s3 + $0x50] sm:$0xff]
      %v462 = vld [vmem:[%s3 + $0x58] sm:$0xff]
      %v463 = vld [vmem:[%s3 + $0x60] sm:$0xff]
      %v464 = vld [vmem:[%s3 + $0x68] sm:$0xff]
      %v465 = vld [vmem:[%s3 + $0x70] sm:$0xff]
      %v466 = vld [vmem:[%s3 + $0x78] sm:$0xff]
      %v467 = vld [vmem:[%s4] sm:$0x1]
      %v469 = vlaneseq
      %v470 = vshrl.u32 %v469, 7
      %v471 = vsub.s32 0, %v470
      %v472 = vrot.slane %v467, %v471
      %474 = vmatprep.subr.mxu0 0.0
      %475 = vmatpush1.msra.mxu0 %v466
      %476 = vmatprep.subr.mxu0 0.0
      %477 = vmatpush1.msra.mxu0 %v465
      %478 = vmatprep.subr.mxu0 0.0
      %479 = vmatpush1.msra.mxu0 %v464
      %480 = vmatprep.subr.mxu0 0.0
      %481 = vmatpush1.msra.mxu0 %v463
      %482 = vmatprep.subr.mxu0 0.0
      %483 = vmatpush1.msra.mxu0 %v462
      %484 = vmatprep.subr.mxu0 0.0
      %485 = vmatpush1.msra.mxu0 %v461
      %486 = vmatprep.subr.mxu0 0.0
      %487 = vmatpush1.msra.mxu0 %v460
      %488 = vmatprep.subr.mxu0 0.0
      %489 = vmatpush1.msra.mxu0 %v459
      %490 = vmatprep.subr.mxu0 0.0
      %491 = vmatpush1.msra.mxu0 %v458
      %492 = vmatprep.subr.mxu0 0.0
      %493 = vmatpush1.msra.mxu0 %v457
      %494 = vmatprep.subr.mxu0 0.0
      %495 = vmatpush1.msra.mxu0 %v456
      %496 = vmatprep.subr.mxu0 0.0
      %497 = vmatpush1.msra.mxu0 %v455
      %498 = vmatprep.subr.mxu0 0.0
      %499 = vmatpush1.msra.mxu0 %v454
      %500 = vmatprep.subr.mxu0 0.0
      %501 = vmatpush1.msra.mxu0 %v453
      %502 = vmatprep.subr.mxu0 0.0
      %503 = vmatpush1.msra.mxu0 %v452
      %504 = vmatprep.subr.mxu0 0.0
      %505 = vmatpush1.msra.mxu0 %v451
      %506 = vmatprep.subr.mxu0 0.0
      %507 = vmatpush2.msra.mxu0 0.0
      %508 = vmatprep.subr.mxu0 0.0
      %509 = vmatpush2.msra.mxu0 0.0
      %510 = vmatprep.subr.mxu0 0.0
      %511 = vmatpush2.msra.mxu0 0.0
      %512 = vmatprep.subr.mxu0 0.0
      %513 = vmatpush2.msra.mxu0 0.0
      %514 = vmatprep.subr.mxu0 0.0
      %515 = vmatpush2.msra.mxu0 0.0
      %516 = vmatprep.subr.mxu0 0.0
      %517 = vmatpush2.msra.mxu0 0.0
      %518 = vmatprep.subr.mxu0 0.0
      %519 = vmatpush2.msra.mxu0 0.0
      %520 = vmatprep.subr.mxu0 0.0
      %521 = vmatpush2.msra.mxu0 0.0
      %522 = vmatprep.subr.mxu0 0.0
      %523 = vmatpush2.msra.mxu0 0.0
      %524 = vmatprep.subr.mxu0 0.0
      %525 = vmatpush2.msra.mxu0 0.0
      %526 = vmatprep.subr.mxu0 0.0
      %527 = vmatpush2.msra.mxu0 0.0
      %528 = vmatprep.subr.mxu0 0.0
      %529 = vmatpush2.msra.mxu0 0.0
      %530 = vmatprep.subr.mxu0 0.0
      %531 = vmatpush2.msra.mxu0 0.0
      %532 = vmatprep.subr.mxu0 0.0
      %533 = vmatpush2.msra.mxu0 0.0
      %534 = vmatprep.subr.mxu0 0.0
      %535 = vmatpush2.msra.mxu0 0.0
      %536 = vmatprep.subr.mxu0 0.0
      %537 = vmatpush2.msra.mxu0 0.0
      %538 = vmatprep.mubr.f32.mxu0 0.0
      %539 = vmatmul.mubr.f32.gmra.mxu0 %v447
      %v540 = vpop.f32.mrf.mxu0
      %v541 = vadd.f32 %v472, %v540
      %v542 = vpop.f32.mrf.mxu0
      %543 = vmatprep.mubr.f32.mxu0 0.0
      %544 = vmatmul.mubr.f32.gmra.mxu0 %v448
      %v545 = vpop.f32.mrf.mxu0
      %v546 = vadd.f32 %v472, %v545
      %v547 = vpop.f32.mrf.mxu0
      %548 = vmatprep.mubr.f32.mxu0 0.0
      %549 = vmatmul.mubr.f32.gmra.mxu0 %v449
      %v550 = vpop.f32.mrf.mxu0
      %v551 = vadd.f32 %v472, %v550
      %v552 = vpop.f32.mrf.mxu0
      %553 = vmatprep.mubr.f32.mxu0 0.0
      %554 = vmatmul.mubr.f32.gmra.mxu0 %v450
      %v555 = vpop.f32.mrf.mxu0
      %v556 = vadd.f32 %v472, %v555
      %v557 = vpop.f32.mrf.mxu0
      %558 = vdwg.mxu0
      %v559 = vmax.f32 %v541, 0.0
      %v560 = vmax.f32 %v546, 0.0
      %v561 = vmax.f32 %v551, 0.0
      %v562 = vmax.f32 %v556, 0.0
      %v563 = vld [vmem:[%s5] sm:$0xff]
      %v564 = vld [vmem:[%s5 + $0x8] sm:$0xff]
      %v565 = vld [vmem:[%s5 + $0x10] sm:$0xff]
      %v566 = vld [vmem:[%s5 + $0x18] sm:$0xff]
      %v567 = vld [vmem:[%s5 + $0x20] sm:$0xff]
      %v568 = vld [vmem:[%s5 + $0x28] sm:$0xff]
      %v569 = vld [vmem:[%s5 + $0x30] sm:$0xff]
      %v570 = vld [vmem:[%s5 + $0x38] sm:$0xff]
      %v571 = vld [vmem:[%s5 + $0x40] sm:$0xff]
      %v572 = vld [vmem:[%s5 + $0x48] sm:$0xff]
      %v573 = vld [vmem:[%s5 + $0x50] sm:$0xff]
      %v574 = vld [vmem:[%s5 + $0x58] sm:$0xff]
      %v575 = vld [vmem:[%s5 + $0x60] sm:$0xff]
      %v576 = vld [vmem:[%s5 + $0x68] sm:$0xff]
      %v577 = vld [vmem:[%s5 + $0x70] sm:$0xff]
      %v578 = vld [vmem:[%s5 + $0x78] sm:$0xff]
      %v579 = vld [vmem:[%s6] sm:$0x1]
      %v581 = vlaneseq
      %v582 = vshrl.u32 %v581, 7
      %v583 = vsub.s32 0, %v582
      %v584 = vrot.slane %v579, %v583
      %586 = vmatprep.subr.mxu0 0.0
      %587 = vmatpush1.msra.mxu0 %v578
      %588 = vmatprep.subr.mxu0 0.0
      %589 = vmatpush1.msra.mxu0 %v577
      %590 = vmatprep.subr.mxu0 0.0
      %591 = vmatpush1.msra.mxu0 %v576
      %592 = vmatprep.subr.mxu0 0.0
      %593 = vmatpush1.msra.mxu0 %v575
      %594 = vmatprep.subr.mxu0 0.0
      %595 = vmatpush1.msra.mxu0 %v574
      %596 = vmatprep.subr.mxu0 0.0
      %597 = vmatpush1.msra.mxu0 %v573
      %598 = vmatprep.subr.mxu0 0.0
      %599 = vmatpush1.msra.mxu0 %v572
      %600 = vmatprep.subr.mxu0 0.0
      %601 = vmatpush1.msra.mxu0 %v571
      %602 = vmatprep.subr.mxu0 0.0
      %603 = vmatpush1.msra.mxu0 %v570
      %604 = vmatprep.subr.mxu0 0.0
      %605 = vmatpush1.msra.mxu0 %v569
      %606 = vmatprep.subr.mxu0 0.0
      %607 = vmatpush1.msra.mxu0 %v568
      %608 = vmatprep.subr.mxu0 0.0
      %609 = vmatpush1.msra.mxu0 %v567
      %610 = vmatprep.subr.mxu0 0.0
      %611 = vmatpush1.msra.mxu0 %v566
      %612 = vmatprep.subr.mxu0 0.0
      %613 = vmatpush1.msra.mxu0 %v565
      %614 = vmatprep.subr.mxu0 0.0
      %615 = vmatpush1.msra.mxu0 %v564
      %616 = vmatprep.subr.mxu0 0.0
      %617 = vmatpush1.msra.mxu0 %v563
      %618 = vmatprep.subr.mxu0 0.0
      %619 = vmatpush2.msra.mxu0 0.0
      %620 = vmatprep.subr.mxu0 0.0
      %621 = vmatpush2.msra.mxu0 0.0
      %622 = vmatprep.subr.mxu0 0.0
      %623 = vmatpush2.msra.mxu0 0.0
      %624 = vmatprep.subr.mxu0 0.0
      %625 = vmatpush2.msra.mxu0 0.0
      %626 = vmatprep.subr.mxu0 0.0
      %627 = vmatpush2.msra.mxu0 0.0
      %628 = vmatprep.subr.mxu0 0.0
      %629 = vmatpush2.msra.mxu0 0.0
      %630 = vmatprep.subr.mxu0 0.0
      %631 = vmatpush2.msra.mxu0 0.0
      %632 = vmatprep.subr.mxu0 0.0
      %633 = vmatpush2.msra.mxu0 0.0
      %634 = vmatprep.subr.mxu0 0.0
      %635 = vmatpush2.msra.mxu0 0.0
      %636 = vmatprep.subr.mxu0 0.0
      %637 = vmatpush2.msra.mxu0 0.0
      %638 = vmatprep.subr.mxu0 0.0
      %639 = vmatpush2.msra.mxu0 0.0
      %640 = vmatprep.subr.mxu0 0.0
      %641 = vmatpush2.msra.mxu0 0.0
      %642 = vmatprep.subr.mxu0 0.0
      %643 = vmatpush2.msra.mxu0 0.0
      %644 = vmatprep.subr.mxu0 0.0
      %645 = vmatpush2.msra.mxu0 0.0
      %646 = vmatprep.subr.mxu0 0.0
      %647 = vmatpush2.msra.mxu0 0.0
      %648 = vmatprep.subr.mxu0 0.0
      %649 = vmatpush2.msra.mxu0 0.0
      %650 = vmatprep.mubr.f32.mxu0 0.0
      %651 = vmatmul.mubr.f32.gmra.mxu0 %v559
      %v652 = vpop.f32.mrf.mxu0
      %v653 = vadd.f32 %v584, %v652
      %v654 = vpop.f32.mrf.mxu0
      %655 = vmatprep.mubr.f32.mxu0 0.0
      %656 = vmatmul.mubr.f32.gmra.mxu0 %v560
      %v657 = vpop.f32.mrf.mxu0
      %v658 = vadd.f32 %v584, %v657
      %v659 = vpop.f32.mrf.mxu0
      %660 = vmatprep.mubr.f32.mxu0 0.0
      %661 = vmatmul.mubr.f32.gmra.mxu0 %v561
      %v662 = vpop.f32.mrf.mxu0
      %v663 = vadd.f32 %v584, %v662
      %v664 = vpop.f32.mrf.mxu0
      %665 = vmatprep.mubr.f32.mxu0 0.0
      %666 = vmatmul.mubr.f32.gmra.mxu0 %v562
      %v667 = vpop.f32.mrf.mxu0
      %v668 = vadd.f32 %v584, %v667
      %v669 = vpop.f32.mrf.mxu0
      %670 = vdwg.mxu0
      %v671 = vmax.f32 %v653, 0.0
      %v672 = vmax.f32 %v658, 0.0
      %v673 = vmax.f32 %v663, 0.0
      %v674 = vmax.f32 %v668, 0.0
      %v675 = vld [vmem:[%s7] sm:$0xff]
      %v676 = vld [vmem:[%s7 + $0x8] sm:$0xff]
      %v677 = vld [vmem:[%s7 + $0x10] sm:$0xff]
      %v678 = vld [vmem:[%s7 + $0x18] sm:$0xff]
      %v679 = vld [vmem:[%s7 + $0x20] sm:$0xff]
      %v680 = vld [vmem:[%s7 + $0x28] sm:$0xff]
      %v681 = vld [vmem:[%s7 + $0x30] sm:$0xff]
      %v682 = vld [vmem:[%s7 + $0x38] sm:$0xff]
      %v683 = vld [vmem:[%s7 + $0x40] sm:$0xff]
      %v684 = vld [vmem:[%s7 + $0x48] sm:$0xff]
      %v685 = vld [vmem:[%s7 + $0x50] sm:$0xff]
      %v686 = vld [vmem:[%s7 + $0x58] sm:$0xff]
      %v687 = vld [vmem:[%s7 + $0x60] sm:$0xff]
      %v688 = vld [vmem:[%s7 + $0x68] sm:$0xff]
      %v689 = vld [vmem:[%s7 + $0x70] sm:$0xff]
      %v690 = vld [vmem:[%s7 + $0x78] sm:$0xff]
      %v691 = vld [vmem:[%s8] sm:$0x1]
      %v693 = vlaneseq
      %v694 = vshrl.u32 %v693, 7
      %v695 = vsub.s32 0, %v694
      %v696 = vrot.slane %v691, %v695
      %698 = vmatprep.subr.mxu0 0.0
      %699 = vmatpush1.msra.mxu0 %v690
      %700 = vmatprep.subr.mxu0 0.0
      %701 = vmatpush1.msra.mxu0 %v689
      %702 = vmatprep.subr.mxu0 0.0
      %703 = vmatpush1.msra.mxu0 %v688
      %704 = vmatprep.subr.mxu0 0.0
      %705 = vmatpush1.msra.mxu0 %v687
      %706 = vmatprep.subr.mxu0 0.0
      %707 = vmatpush1.msra.mxu0 %v686
      %708 = vmatprep.subr.mxu0 0.0
      %709 = vmatpush1.msra.mxu0 %v685
      %710 = vmatprep.subr.mxu0 0.0
      %711 = vmatpush1.msra.mxu0 %v684
      %712 = vmatprep.subr.mxu0 0.0
      %713 = vmatpush1.msra.mxu0 %v683
      %714 = vmatprep.subr.mxu0 0.0
      %715 = vmatpush1.msra.mxu0 %v682
      %716 = vmatprep.subr.mxu0 0.0
      %717 = vmatpush1.msra.mxu0 %v681
      %718 = vmatprep.subr.mxu0 0.0
      %719 = vmatpush1.msra.mxu0 %v680
      %720 = vmatprep.subr.mxu0 0.0
      %721 = vmatpush1.msra.mxu0 %v679
      %722 = vmatprep.subr.mxu0 0.0
      %723 = vmatpush1.msra.mxu0 %v678
      %724 = vmatprep.subr.mxu0 0.0
      %725 = vmatpush1.msra.mxu0 %v677
      %726 = vmatprep.subr.mxu0 0.0
      %727 = vmatpush1.msra.mxu0 %v676
      %728 = vmatprep.subr.mxu0 0.0
      %729 = vmatpush1.msra.mxu0 %v675
      %730 = vmatprep.subr.mxu0 0.0
      %731 = vmatpush2.msra.mxu0 0.0
      %732 = vmatprep.subr.mxu0 0.0
      %733 = vmatpush2.msra.mxu0 0.0
      %734 = vmatprep.subr.mxu0 0.0
      %735 = vmatpush2.msra.mxu0 0.0
      %736 = vmatprep.subr.mxu0 0.0
      %737 = vmatpush2.msra.mxu0 0.0
      %738 = vmatprep.subr.mxu0 0.0
      %739 = vmatpush2.msra.mxu0 0.0
      %740 = vmatprep.subr.mxu0 0.0
      %741 = vmatpush2.msra.mxu0 0.0
      %742 = vmatprep.subr.mxu0 0.0
      %743 = vmatpush2.msra.mxu0 0.0
      %744 = vmatprep.subr.mxu0 0.0
      %745 = vmatpush2.msra.mxu0 0.0
      %746 = vmatprep.subr.mxu0 0.0
      %747 = vmatpush2.msra.mxu0 0.0
      %748 = vmatprep.subr.mxu0 0.0
      %749 = vmatpush2.msra.mxu0 0.0
      %750 = vmatprep.subr.mxu0 0.0
      %751 = vmatpush2.msra.mxu0 0.0
      %752 = vmatprep.subr.mxu0 0.0
      %753 = vmatpush2.msra.mxu0 0.0
      %754 = vmatprep.subr.mxu0 0.0
      %755 = vmatpush2.msra.mxu0 0.0
      %756 = vmatprep.subr.mxu0 0.0
      %757 = vmatpush2.msra.mxu0 0.0
      %758 = vmatprep.subr.mxu0 0.0
      %759 = vmatpush2.msra.mxu0 0.0
      %760 = vmatprep.subr.mxu0 0.0
      %761 = vmatpush2.msra.mxu0 0.0
      %762 = vmatprep.mubr.f32.mxu0 0.0
      %763 = vmatmul.mubr.f32.gmra.mxu0 %v671
      %v764 = vpop.f32.mrf.mxu0
      %v765 = vadd.f32 %v696, %v764
      %v766 = vpop.f32.mrf.mxu0
      %767 = vmatprep.mubr.f32.mxu0 0.0
      %768 = vmatmul.mubr.f32.gmra.mxu0 %v672
      %v769 = vpop.f32.mrf.mxu0
      %v770 = vadd.f32 %v696, %v769
      %v771 = vpop.f32.mrf.mxu0
      %772 = vmatprep.mubr.f32.mxu0 0.0
      %773 = vmatmul.mubr.f32.gmra.mxu0 %v673
      %v774 = vpop.f32.mrf.mxu0
      %v775 = vadd.f32 %v696, %v774
      %v776 = vpop.f32.mrf.mxu0
      %777 = vmatprep.mubr.f32.mxu0 0.0
      %778 = vmatmul.mubr.f32.gmra.mxu0 %v674
      %v779 = vpop.f32.mrf.mxu0
      %v780 = vadd.f32 %v696, %v779
      %v781 = vpop.f32.mrf.mxu0
      %782 = vdwg.mxu0
      %vm783 = vcmask 31744
      %784 = vst.msk [vmem:[%s334] sm:$0xff] %vm783, %v765
      %785 = vst.msk [vmem:[%s334 + $0x8] sm:$0xff] %vm783, %v770
      %786 = vst.msk [vmem:[%s334 + $0x10] sm:$0xff] %vm783, %v775
      %787 = vst.msk [vmem:[%s334 + $0x18] sm:$0xff] %vm783, %v780
      %s788 = smul.u32 4, %s20
      %p789 = scmp.lt.s32.totalorder %s788, 15
      %s790 = scalar_select %p789, %s788, 15
      %s791 = smul.addr %s790, 8
      %s792 = scalar_lea.vmem %s9, %s791
      // Predicated region
      $region57: #{tpu_custom_call.1} parent=55 // pred_check
        %p793 = pneg %p232
      $region58: #{tpu_custom_call.1} parent=55 // pred_check_branch
        %795 = sbr.rel (%p793) target = $region60
      $region59: #{tpu_custom_call.1} parent=55 // pred_region
        %s796 = smul.u32 4, %s20
      $region60: #{tpu_custom_call.1} parent=55 // pred_fallthru
        _
    $region56: #{tpu_custom_call.1} parent=5 // pred_fallthru
      _
    %p797 = scmp.le.s32.totalorder 2, %s15
    // Predicated region
    $region61: #{tpu_custom_call.1} parent=5 // pred_check
      %p798 = pneg %p797
    $region62: #{tpu_custom_call.1} parent=5 // pred_check_branch
      %800 = sbr.rel (%p798) target = $region64
    $region63: #{tpu_custom_call.1} parent=5 // pred_region
      %s801 = ssub.s32 %s15, 2
      // Predicated region
      $region65: #{tpu_custom_call.1} parent=63 // pred_check
        %p802 = pneg %p238
      $region66: #{tpu_custom_call.1} parent=63 // pred_check_branch
        %804 = sbr.rel (%p802) target = $region68
      $region67: #{tpu_custom_call.1} parent=63 // pred_region
        %s805 = smul.u32 4, %s21
        %p806 = scmp.lt.s32.totalorder %s805, 15
        %s807 = scalar_select %p806, %s805, 15
        %s808 = smul.addr %s807, 8
        %s809 = scalar_lea.vmem %s9, %s808
      $region68: #{tpu_custom_call.1} parent=63 // pred_fallthru
        _
    $region64: #{tpu_custom_call.1} parent=5 // pred_fallthru
      _
  $region6: #{tpu_custom_call.1} parent=0 // loop_footer
    %s19 = sadd.s32 1, %s15
  $region7: #{tpu_custom_call.1} parent=0 // loop_footer_branch
    %14 = sbr.rel target = $region3
  $region8: #{tpu_custom_call.1} parent=0 // loop_exit
    _

</llo_original>
